<compile_context>
chip_gen: v5e
topology: v5e:2x2
jax: 0.10.0
libtpu: 0.0.40
codegen_flags: <defaults>
</compile_context>

<pallas_src>
import functools
import math

import jax
import jax.numpy as jnp
from jax.experimental import pallas as pl
from jax.experimental.pallas import tpu as pltpu


_LANE = 128        # output/feature lane padding
_SUBLANE = 8       # f32 sublane granularity for the batch tile
_MAX_TILE_M = 1024 # cap on rows per grid step


def _round_up(x, m):
    return ((x + m - 1) // m) * m


def _pick_batch_tiling(m):
    """Return (tile_m, m_pad): tile_m multiple of 8, m_pad = n_blocks * tile_m.

    Ensures >= 2 grid blocks when m >= 16 (so v7x's two TensorCores both get
    work under dimension_semantics=('parallel',)) while keeping the batch
    padding overhead small.
    """
    if m < 16:
        tm = _round_up(m, _SUBLANE)
        return tm, tm
    min_blocks = max(2, pl.cdiv(m, _MAX_TILE_M))
    best = None
    for nb in range(min_blocks, min_blocks + 8):
        tm = _round_up(pl.cdiv(m, nb), _SUBLANE)
        m_pad = nb * tm
        if best is None or m_pad < best[1]:
            best = (tm, m_pad)
        if m_pad - m < _SUBLANE:  # cannot beat plain sublane rounding
            break
    return best


def _fused_mlp_kernel(*refs, n_layers):
    """refs = (x_ref, w0_ref, b0_ref, ..., w{L-1}_ref, b{L-1}_ref, o_ref).

    Whole MLP for one M-tile in VMEM: h = x; per layer h = act(h @ W + b).
    ELU on hidden layers, sigmoid on the last. bf16 MXU operands, f32
    accumulate and f32 elementwise math.
    """
    x_ref = refs[0]
    o_ref = refs[-1]
    h = x_ref[...].astype(jnp.float32)
    for li in range(n_layers):
        w = refs[1 + 2 * li][...]                      # bf16 (p_in, p_out)
        b = refs[2 + 2 * li][...]                      # f32  (1, p_out)
        y = jnp.dot(h.astype(jnp.bfloat16), w,
                    preferred_element_type=jnp.float32) + b
        if li == n_layers - 1:
            # sigmoid(y) = 1 / (1 + exp(-y)); approx reciprocal stays on EUP.
            e = jnp.exp(jnp.minimum(-y, 60.0))
            h = pl.reciprocal(1.0 + e, approx=True)
        else:
            # ELU(alpha=1): y if y > 0 else exp(y) - 1 (exp arg clamped at 0).
            h = jnp.where(y > 0.0, y, jnp.exp(jnp.minimum(y, 0.0)) - 1.0)
    o_ref[...] = h.astype(o_ref.dtype)


def prepare_regular_mlp_params(params):
    """One-time transform of (W, b) params for the fused kernel.

    Pads each weight's output dim to a multiple of 128 (lane-dense), chains
    the padded width into the next layer's input dim (first layer keeps the
    true, unpadded K), casts weights to bf16 and keeps biases in f32. Call
    once and reuse the result across forward calls.
    """
    if not params:
        return None  # layers_config is None -> identity network
    k_true = params[0][0].shape[0]
    out_dim = params[-1][0].shape[1]
    pdims = [k_true] + [_round_up(w.shape[1], _LANE) for (w, _) in params]
    padded = []
    for li, (w, b) in enumerate(params):
        d_in, d_out = w.shape
        p_in, p_out = pdims[li], pdims[li + 1]
        w_p = jnp.zeros((p_in, p_out), jnp.bfloat16)
        w_p = w_p.at[:d_in, :d_out].set(w.astype(jnp.bfloat16))
        b_p = jnp.zeros((1, p_out), jnp.float32)
        b_p = b_p.at[:, :d_out].set(b.astype(jnp.float32))
        padded.append((w_p, b_p))
    return {"padded": padded, "pdims": pdims, "out_dim": out_dim,
            "k_true": k_true}


def regular_mlp_forward(x, prepared):
    """Forward pass of RegularMLP in eval mode (Dropout == identity).

    x: (M, input_dim) float32
    prepared: output of prepare_regular_mlp_params (or None for identity).
    """
    # TODO(synk): training-mode Dropout (stochastic masking via pltpu.prng_*)
    # is not implemented; eval-mode Dropout is identity.
    if prepared is None:
        return x

    M, K = x.shape
    assert K == prepared["k_true"], (K, prepared["k_true"])
    padded = prepared["padded"]
    pdims = prepared["pdims"]
    out_dim = prepared["out_dim"]
    n_layers = len(padded)

    tm, m_pad = _pick_batch_tiling(M)
    x_p = x if m_pad == M else jnp.zeros((m_pad, K), x.dtype).at[:M].set(x)

    inputs = [x_p]
    in_specs = [pl.BlockSpec((tm, K), lambda i: (i, 0))]

    flops = 0
    transcendentals = 0
    bytes_accessed = 4 * m_pad * K + 4 * m_pad * pdims[-1]
    vmem_est = 2 * (tm * K * 4 + tm * pdims[-1] * 4)      # double-buffered I/O
    for w_p, b_p in padded:
        p_in, p_out = w_p.shape
        inputs += [w_p, b_p]
        in_specs += [
            # Constant index_map -> fetched once, VMEM-resident across grid.
            pl.BlockSpec((p_in, p_out), lambda i: (0, 0)),
            pl.BlockSpec((1, p_out), lambda i: (0, 0)),
        ]
        flops += 2 * m_pad * p_in * p_out
        transcendentals += m_pad * p_out                  # one exp / element
        bytes_accessed += 2 * p_in * p_out + 4 * p_out
        vmem_est += 2 * (2 * p_in * p_out + 4 * p_out)
    vmem_est += 3 * tm * max(pdims) * 4                   # in-kernel temps
    vmem_limit = int(min(48 << 20, max(16 << 20, 2 * vmem_est)))

    out_p = pl.pallas_call(
        functools.partial(_fused_mlp_kernel, n_layers=n_layers),
        out_shape=jax.ShapeDtypeStruct((m_pad, pdims[-1]), x.dtype),
        grid=(m_pad // tm,),
        in_specs=in_specs,
        out_specs=pl.BlockSpec((tm, pdims[-1]), lambda i: (i, 0)),
        compiler_params=pltpu.CompilerParams(
            dimension_semantics=("parallel",),
            vmem_limit_bytes=vmem_limit,
        ),
        cost_estimate=pl.CostEstimate(
            flops=flops,
            transcendentals=transcendentals,
            bytes_accessed=bytes_accessed,
        ),
    )(*inputs)

    return out_p[:M, :out_dim]


def init_regular_mlp_params(key, input_dim, output_dim, layers_config):
    """Deterministic init mimicking nn.Linear default U(-1/sqrt(in), 1/sqrt(in)).

    Weights stored as (in_features, out_features) — i.e. PyTorch weight.T.
    """
    params = []
    dims = [input_dim] + list(layers_config) + [output_dim]
    for i in range(len(dims) - 1):
        d_in, d_out = dims[i], dims[i + 1]
        key, kw, kb = jax.random.split(key, 3)
        bound = 1.0 / math.sqrt(d_in)
        w = jax.random.uniform(kw, (d_in, d_out), jnp.float32, -bound, bound)
        b = jax.random.uniform(kb, (1, d_out), jnp.float32, -bound, bound)
        params.append((w, b))
    return params


def _reference_forward(x, params):
    """Pure-JAX reference mirroring the kernel's numerics (bf16 dot operands,
    f32 accumulate) but with exact sigmoid."""
    n = len(params)
    h = x.astype(jnp.float32)
    for i, (w, b) in enumerate(params):
        y = jnp.dot(h.astype(jnp.bfloat16), w.astype(jnp.bfloat16),
                    preferred_element_type=jnp.float32) + b
        if i == n - 1:
            h = jax.nn.sigmoid(y)
        else:
            h = jnp.where(y > 0, y, jnp.exp(jnp.minimum(y, 0.0)) - 1.0)
    return h


if __name__ == "__main__":
    # Small shapes consistent with the module's forward.
    input_dim = 32
    layers_config = [32, 16]
    output_dim = 4
    dropout = 0.1  # identity in eval mode

    key = jax.random.PRNGKey(0)
    key, kx1, kx2 = jax.random.split(key, 3)
    params = init_regular_mlp_params(key, input_dim, output_dim, layers_config)
    prepared = prepare_regular_mlp_params(params)   # one-time pad + bf16 cast

    # Case 1: tiny batch (single grid block).
    x1 = jax.random.normal(kx1, (8, input_dim), jnp.float32)
    out1 = jax.block_until_ready(regular_mlp_forward(x1, prepared))
    ref1 = _reference_forward(x1, params)
    assert out1.shape == (8, output_dim), out1.shape
    err1 = float(jnp.max(jnp.abs(out1 - ref1)))
    assert err1 < 5e-3, err1

    # Case 2: non-multiple-of-8 batch (exercises batch padding + 2-block grid).
    x2 = jax.random.normal(kx2, (37, input_dim), jnp.float32)
    out2 = jax.block_until_ready(regular_mlp_forward(x2, prepared))
    ref2 = _reference_forward(x2, params)
    assert out2.shape == (37, output_dim), out2.shape
    err2 = float(jnp.max(jnp.abs(out2 - ref2)))
    assert err2 < 5e-3, err2

    print("KERNEL_OK")
</pallas_src>

<mosaic_0001>
module attributes {stable_mosaic.version = 11 : i64} {
  func.func @_fused_mlp_kernel(%arg0: i32, %arg1: memref<8x32xf32, #tpu.memory_space<vmem>>, %arg2: memref<32x128xbf16, #tpu.memory_space<vmem>>, %arg3: memref<1x128xf32, #tpu.memory_space<vmem>>, %arg4: memref<128x128xbf16, #tpu.memory_space<vmem>>, %arg5: memref<1x128xf32, #tpu.memory_space<vmem>>, %arg6: memref<128x128xbf16, #tpu.memory_space<vmem>>, %arg7: memref<1x128xf32, #tpu.memory_space<vmem>>, %arg8: memref<8x128xf32, #tpu.memory_space<vmem>>) attributes {dimension_semantics = [#tpu.dimension_semantics<parallel>], iteration_bounds = array<i64: 1>, scalar_prefetch = 0 : i64, scratch_operands = 0 : i64, tpu.core_type = #tpu.core_type<tc>, window_params = [{transform_indices = @transform_0, window_bounds = array<i64: 8, 32>}, {pipeline_mode = #tpu.pipeline_mode<synchronous>, transform_indices = @transform_1, window_bounds = array<i64: 32, 128>}, {pipeline_mode = #tpu.pipeline_mode<synchronous>, transform_indices = @transform_2, window_bounds = array<i64: 1, 128>}, {pipeline_mode = #tpu.pipeline_mode<synchronous>, transform_indices = @transform_3, window_bounds = array<i64: 128, 128>}, {pipeline_mode = #tpu.pipeline_mode<synchronous>, transform_indices = @transform_4, window_bounds = array<i64: 1, 128>}, {pipeline_mode = #tpu.pipeline_mode<synchronous>, transform_indices = @transform_5, window_bounds = array<i64: 128, 128>}, {pipeline_mode = #tpu.pipeline_mode<synchronous>, transform_indices = @transform_6, window_bounds = array<i64: 1, 128>}, {transform_indices = @transform_7, window_bounds = array<i64: 8, 128>}]} {
    %c0 = arith.constant 0 : index
    %c0_0 = arith.constant 0 : index
    %0 = vector.load %arg1[%c0, %c0_0] : memref<8x32xf32, #tpu.memory_space<vmem>>, vector<8x32xf32>
    %c0_1 = arith.constant 0 : index
    %c0_2 = arith.constant 0 : index
    %1 = vector.load %arg2[%c0_1, %c0_2] : memref<32x128xbf16, #tpu.memory_space<vmem>>, vector<32x128xbf16>
    %c0_3 = arith.constant 0 : index
    %c0_4 = arith.constant 0 : index
    %2 = vector.load %arg3[%c0_3, %c0_4] : memref<1x128xf32, #tpu.memory_space<vmem>>, vector<1x128xf32>
    %3 = arith.truncf %0 : vector<8x32xf32> to vector<8x32xbf16>
    %cst = arith.constant dense<0.000000e+00> : vector<8x128xf32>
    %4 = tpu.matmul %3, %1, %cst {dimension_numbers = #tpu.dot_dimension_numbers<[1], [0], [0], [1], [0, 0, 1, 1], [], []>} : vector<8x32xbf16>, vector<32x128xbf16>, vector<8x128xf32> -> vector<8x128xf32>
    %5 = vector.broadcast %2 : vector<1x128xf32> to vector<8x128xf32>
    %6 = arith.addf %4, %5 : vector<8x128xf32>
    %cst_5 = arith.constant 0.000000e+00 : f32
    %7 = vector.broadcast %cst_5 : f32 to vector<8x128xf32>
    %8 = arith.cmpf ogt, %6, %7 : vector<8x128xf32>
    %cst_6 = arith.constant 0.000000e+00 : f32
    %9 = vector.broadcast %cst_6 : f32 to vector<8x128xf32>
    %10 = arith.minimumf %6, %9 : vector<8x128xf32>
    %11 = math.exp %10 : vector<8x128xf32>
    %cst_7 = arith.constant 1.000000e+00 : f32
    %12 = vector.broadcast %cst_7 : f32 to vector<8x128xf32>
    %13 = arith.subf %11, %12 : vector<8x128xf32>
    %14 = arith.select %8, %6, %13 : vector<8x128xi1>, vector<8x128xf32>
    %c0_8 = arith.constant 0 : index
    %c0_9 = arith.constant 0 : index
    %15 = vector.load %arg4[%c0_8, %c0_9] : memref<128x128xbf16, #tpu.memory_space<vmem>>, vector<128x128xbf16>
    %c0_10 = arith.constant 0 : index
    %c0_11 = arith.constant 0 : index
    %16 = vector.load %arg5[%c0_10, %c0_11] : memref<1x128xf32, #tpu.memory_space<vmem>>, vector<1x128xf32>
    %17 = arith.truncf %14 : vector<8x128xf32> to vector<8x128xbf16>
    %cst_12 = arith.constant dense<0.000000e+00> : vector<8x128xf32>
    %18 = tpu.matmul %17, %15, %cst_12 {dimension_numbers = #tpu.dot_dimension_numbers<[1], [0], [0], [1], [0, 0, 1, 1], [], []>} : vector<8x128xbf16>, vector<128x128xbf16>, vector<8x128xf32> -> vector<8x128xf32>
    %19 = vector.broadcast %16 : vector<1x128xf32> to vector<8x128xf32>
    %20 = arith.addf %18, %19 : vector<8x128xf32>
    %cst_13 = arith.constant 0.000000e+00 : f32
    %21 = vector.broadcast %cst_13 : f32 to vector<8x128xf32>
    %22 = arith.cmpf ogt, %20, %21 : vector<8x128xf32>
    %cst_14 = arith.constant 0.000000e+00 : f32
    %23 = vector.broadcast %cst_14 : f32 to vector<8x128xf32>
    %24 = arith.minimumf %20, %23 : vector<8x128xf32>
    %25 = math.exp %24 : vector<8x128xf32>
    %cst_15 = arith.constant 1.000000e+00 : f32
    %26 = vector.broadcast %cst_15 : f32 to vector<8x128xf32>
    %27 = arith.subf %25, %26 : vector<8x128xf32>
    %28 = arith.select %22, %20, %27 : vector<8x128xi1>, vector<8x128xf32>
    %c0_16 = arith.constant 0 : index
    %c0_17 = arith.constant 0 : index
    %29 = vector.load %arg6[%c0_16, %c0_17] : memref<128x128xbf16, #tpu.memory_space<vmem>>, vector<128x128xbf16>
    %c0_18 = arith.constant 0 : index
    %c0_19 = arith.constant 0 : index
    %30 = vector.load %arg7[%c0_18, %c0_19] : memref<1x128xf32, #tpu.memory_space<vmem>>, vector<1x128xf32>
    %31 = arith.truncf %28 : vector<8x128xf32> to vector<8x128xbf16>
    %cst_20 = arith.constant dense<0.000000e+00> : vector<8x128xf32>
    %32 = tpu.matmul %31, %29, %cst_20 {dimension_numbers = #tpu.dot_dimension_numbers<[1], [0], [0], [1], [0, 0, 1, 1], [], []>} : vector<8x128xbf16>, vector<128x128xbf16>, vector<8x128xf32> -> vector<8x128xf32>
    %33 = vector.broadcast %30 : vector<1x128xf32> to vector<8x128xf32>
    %34 = arith.addf %32, %33 : vector<8x128xf32>
    %cst_21 = arith.constant 0.000000e+00 : f32
    %35 = vector.broadcast %cst_21 : f32 to vector<8x128xf32>
    %36 = arith.subf %35, %34 : vector<8x128xf32>
    %cst_22 = arith.constant 6.000000e+01 : f32
    %37 = vector.broadcast %cst_22 : f32 to vector<8x128xf32>
    %38 = arith.minimumf %36, %37 : vector<8x128xf32>
    %39 = math.exp %38 : vector<8x128xf32>
    %cst_23 = arith.constant 1.000000e+00 : f32
    %40 = vector.broadcast %cst_23 : f32 to vector<8x128xf32>
    %41 = arith.addf %40, %39 : vector<8x128xf32>
    %42 = tpu.reciprocal %41 {approx = true} : vector<8x128xf32> -> vector<8x128xf32>
    %c0_24 = arith.constant 0 : index
    %c0_25 = arith.constant 0 : index
    %43 = vector.load %arg8[%c0_24, %c0_25] : memref<8x128xf32, #tpu.memory_space<vmem>>, vector<8x128xf32>
    tpu.vector_store %arg8[%c0_24, %c0_25], %42 {strides = array<i32>} : memref<8x128xf32, #tpu.memory_space<vmem>>, vector<8x128xf32>,
    return
  }
  func.func @transform_0(%arg0: i32) -> (i32, i32) {
    %c0_i32 = arith.constant 0 : i32
    %c0_i32_0 = arith.constant 0 : i32
    return %arg0, %c0_i32 : i32, i32
  }
  func.func @transform_1(%arg0: i32) -> (i32, i32) {
    %c0_i32 = arith.constant 0 : i32
    %c0_i32_0 = arith.constant 0 : i32
    %c0_i32_1 = arith.constant 0 : i32
    return %c0_i32, %c0_i32_0 : i32, i32
  }
  func.func @transform_2(%arg0: i32) -> (i32, i32) {
    %c0_i32 = arith.constant 0 : i32
    %c0_i32_0 = arith.constant 0 : i32
    %c0_i32_1 = arith.constant 0 : i32
    return %c0_i32, %c0_i32_0 : i32, i32
  }
  func.func @transform_3(%arg0: i32) -> (i32, i32) {
    %c0_i32 = arith.constant 0 : i32
    %c0_i32_0 = arith.constant 0 : i32
    %c0_i32_1 = arith.constant 0 : i32
    return %c0_i32, %c0_i32_0 : i32, i32
  }
  func.func @transform_4(%arg0: i32) -> (i32, i32) {
    %c0_i32 = arith.constant 0 : i32
    %c0_i32_0 = arith.constant 0 : i32
    %c0_i32_1 = arith.constant 0 : i32
    return %c0_i32, %c0_i32_0 : i32, i32
  }
  func.func @transform_5(%arg0: i32) -> (i32, i32) {
    %c0_i32 = arith.constant 0 : i32
    %c0_i32_0 = arith.constant 0 : i32
    %c0_i32_1 = arith.constant 0 : i32
    return %c0_i32, %c0_i32_0 : i32, i32
  }
  func.func @transform_6(%arg0: i32) -> (i32, i32) {
    %c0_i32 = arith.constant 0 : i32
    %c0_i32_0 = arith.constant 0 : i32
    %c0_i32_1 = arith.constant 0 : i32
    return %c0_i32, %c0_i32_0 : i32, i32
  }
  func.func @transform_7(%arg0: i32) -> (i32, i32) {
    %c0_i32 = arith.constant 0 : i32
    %c0_i32_0 = arith.constant 0 : i32
    return %arg0, %c0_i32 : i32, i32
  }
}

</mosaic_0001>

<llo_original>
// kernel: tpu_custom_call.1
$region0: #{tpu_custom_call.1}
  #allocation0 [shape = 'u32[]', space=smem, size = 0x4, offset = 0x4, fixed_abs, tag = 'smem constant byte address 0x4 - core index']
  #allocation1 [shape = 'u32[72,128]{1,0:T(1,128)}', space=vmem, size = 0x9000, scoped, tag = 'internal scratch']
  %s0 = inlined_call_operand.hbm [shape: f32[8,32], index: 0, kind: input, shape index: {}]
  %s1 = inlined_call_operand.hbm [shape: bf16[32,128], index: 1, kind: input, shape index: {}]
  %s2 = inlined_call_operand.vmem [shape: f32[1,128], index: 2, kind: input, shape index: {}]
  %s3 = inlined_call_operand.hbm [shape: bf16[128,128], index: 3, kind: input, shape index: {}]
  %s4 = inlined_call_operand.vmem [shape: f32[1,128], index: 4, kind: input, shape index: {}]
  %s5 = inlined_call_operand.hbm [shape: bf16[128,128], index: 5, kind: input, shape index: {}]
  %s6 = inlined_call_operand.vmem [shape: f32[1,128], index: 6, kind: input, shape index: {}]
  %s7 = inlined_call_operand.hbm [shape: f32[8,128], index: 7, kind: output, shape index: {}]
  %s8 = sld [smem:[#allocation0]]
  $region54: #{tpu_custom_call.1} parent=0
    _
  %s10 = ssub.s32 1, %s8
  %s11 = scalar_select 0, %s10, %s8
  $region1: #{tpu_custom_call.1} parent=0
    #allocation2 [shape = 'u8[4096]{0}', space=vmem, size = 0x1000, scoped, tag = 'input window, operand 0, single buffered']
    #allocation3 [shape = 's32[1]{0}', space=sflag, size = 0x4, scoped, tag = 'scoped memory for tpu_custom_call.1']
    #allocation4 [shape = 's32[1]{0}', space=sflag, size = 0x4, scoped, tag = 'scoped memory for tpu_custom_call.1']
    #allocation5 [shape = 'u8[8192]{0}', space=vmem, size = 0x2000, scoped, tag = 'input window, operand 1, single buffered']
    #allocation6 [shape = 's32[1]{0}', space=sflag, size = 0x4, scoped, tag = 'scoped memory for tpu_custom_call.1']
    #allocation7 [shape = 'u8[32768]{0}', space=vmem, size = 0x8000, scoped, tag = 'input window, operand 3, single buffered']
    #allocation8 [shape = 'u8[32768]{0}', space=vmem, size = 0x8000, scoped, tag = 'input window, operand 5, single buffered']
    #allocation9 [shape = 's32[1]{0}', space=sflag, size = 0x4, scoped, tag = 'scoped memory for tpu_custom_call.1']
    #allocation10 [shape = 'u8[4096]{0}', space=vmem, size = 0x1000, scoped, tag = 'output window, operand 0, single buffered']
    %12 = vsyncpa [#allocation3], 0
    %13 = vsyncpa [#allocation6], 0
    %14 = vsyncpa [#allocation9], 0
    %15 = vsyncpa [#allocation4], 0
    // Predicated region
    $region2: #{tpu_custom_call.1} parent=1 // pred_check
      _
    $region3: #{tpu_custom_call.1} parent=1 // pred_check_branch
      %17 = sbr.rel (0) target = $region5
    $region4: #{tpu_custom_call.1} parent=1 // pred_region
      %19 = vsyncadd [#allocation3], 0
      %s21 = sshll.u32 %s0, 4
      %s22 = int_to_ptr.hbm [resolvable:$true] %s21
      %s23 = sshll.u32 [#allocation2], 4
      %s24 = int_to_ptr.vmem [resolvable:$true] %s23
      %26 = dma.hbm_to_vmem [thread:$0]  %s22, 128, %s24, [#allocation3]
    $region5: #{tpu_custom_call.1} parent=1 // pred_fallthru
      _
    // Predicated region
    $region6: #{tpu_custom_call.1} parent=1 // pred_check
      _
    $region7: #{tpu_custom_call.1} parent=1 // pred_check_branch
      %28 = sbr.rel (0) target = $region9
    $region8: #{tpu_custom_call.1} parent=1 // pred_region
      %30 = vsyncadd [#allocation6], 0
      %s31 = sshll.u32 %s1, 4
      %s32 = int_to_ptr.hbm [resolvable:$true] %s31
      %s33 = sshll.u32 [#allocation5], 4
      %s34 = int_to_ptr.vmem [resolvable:$true] %s33
      %39 = dma.hbm_to_vmem [thread:$0]  %s32, 256, %s34, [#allocation6], 64, 64, 4
    $region9: #{tpu_custom_call.1} parent=1 // pred_fallthru
      _
    // Predicated region
    $region10: #{tpu_custom_call.1} parent=1 // pred_check
      _
    $region11: #{tpu_custom_call.1} parent=1 // pred_check_branch
      %41 = sbr.rel (0) target = $region13
    $region12: #{tpu_custom_call.1} parent=1 // pred_region
      _
    $region13: #{tpu_custom_call.1} parent=1 // pred_fallthru
      _
    // Predicated region
    $region14: #{tpu_custom_call.1} parent=1 // pred_check
      _
    $region15: #{tpu_custom_call.1} parent=1 // pred_check_branch
      %43 = sbr.rel (0) target = $region17
    $region16: #{tpu_custom_call.1} parent=1 // pred_region
      %45 = vsyncadd [#allocation6], 0
      %s46 = sshll.u32 %s3, 4
      %s47 = int_to_ptr.hbm [resolvable:$true] %s46
      %s48 = sshll.u32 [#allocation7], 4
      %s49 = int_to_ptr.vmem [resolvable:$true] %s48
      %54 = dma.hbm_to_vmem [thread:$0]  %s47, 1024, %s49, [#allocation6], 64, 64, 4
    $region17: #{tpu_custom_call.1} parent=1 // pred_fallthru
      _
    // Predicated region
    $region18: #{tpu_custom_call.1} parent=1 // pred_check
      _
    $region19: #{tpu_custom_call.1} parent=1 // pred_check_branch
      %56 = sbr.rel (0) target = $region21
    $region20: #{tpu_custom_call.1} parent=1 // pred_region
      _
    $region21: #{tpu_custom_call.1} parent=1 // pred_fallthru
      _
    // Predicated region
    $region22: #{tpu_custom_call.1} parent=1 // pred_check
      _
    $region23: #{tpu_custom_call.1} parent=1 // pred_check_branch
      %58 = sbr.rel (0) target = $region25
    $region24: #{tpu_custom_call.1} parent=1 // pred_region
      %60 = vsyncadd [#allocation9], 0
      %s61 = sshll.u32 %s5, 4
      %s62 = int_to_ptr.hbm [resolvable:$true] %s61
      %s63 = sshll.u32 [#allocation8], 4
      %s64 = int_to_ptr.vmem [resolvable:$true] %s63
      %69 = dma.hbm_to_vmem [thread:$0]  %s62, 1024, %s64, [#allocation9], 64, 64, 4
    $region25: #{tpu_custom_call.1} parent=1 // pred_fallthru
      _
    // Predicated region
    $region26: #{tpu_custom_call.1} parent=1 // pred_check
      _
    $region27: #{tpu_custom_call.1} parent=1 // pred_check_branch
      %71 = sbr.rel (0) target = $region29
    $region28: #{tpu_custom_call.1} parent=1 // pred_region
      _
    $region29: #{tpu_custom_call.1} parent=1 // pred_fallthru
      _
    // Predicated region
    $region30: #{tpu_custom_call.1} parent=1 // pred_check
      _
    $region31: #{tpu_custom_call.1} parent=1 // pred_check_branch
      %73 = sbr.rel (0) target = $region33
    $region32: #{tpu_custom_call.1} parent=1 // pred_region
      %75 = dma.done [#allocation3], 128
    $region33: #{tpu_custom_call.1} parent=1 // pred_fallthru
      _
    // Predicated region
    $region34: #{tpu_custom_call.1} parent=1 // pred_check
      _
    $region35: #{tpu_custom_call.1} parent=1 // pred_check_branch
      %77 = sbr.rel (0) target = $region37
    $region36: #{tpu_custom_call.1} parent=1 // pred_region
      %79 = dma.done [#allocation6], 256
    $region37: #{tpu_custom_call.1} parent=1 // pred_fallthru
      _
    // Predicated region
    $region38: #{tpu_custom_call.1} parent=1 // pred_check
      _
    $region39: #{tpu_custom_call.1} parent=1 // pred_check_branch
      %81 = sbr.rel (0) target = $region41
    $region40: #{tpu_custom_call.1} parent=1 // pred_region
      %83 = dma.done [#allocation6], 1024
    $region41: #{tpu_custom_call.1} parent=1 // pred_fallthru
      _
    // Predicated region
    $region42: #{tpu_custom_call.1} parent=1 // pred_check
      _
    $region43: #{tpu_custom_call.1} parent=1 // pred_check_branch
      %85 = sbr.rel (0) target = $region45
    $region44: #{tpu_custom_call.1} parent=1 // pred_region
      %87 = dma.done [#allocation9], 1024
    $region45: #{tpu_custom_call.1} parent=1 // pred_fallthru
      _
    %v89 = vld [vmem:[#allocation2] sm:$0xff]
    %v90 = vld [vmem:[#allocation5] sm:$0xf]
    %v91 = vld [vmem:[#allocation5 + $0x4] sm:$0xf]
    %v92 = vld [vmem:[#allocation5 + $0x8] sm:$0xf]
    %v93 = vld [vmem:[#allocation5 + $0xc] sm:$0xf]
    %v94 = vld [vmem:[%s2] sm:$0x1]
    %v95 = vpack.c.bf16 %v89, %v89
    %v97 = vperm.slane %v94, 0
    %v103 = vunpack.c.l.b16 %v90
    %v104 = vunpack.c.l.b16 %v91
    %v105 = vunpack.c.l.b16 %v92
    %v106 = vunpack.c.l.b16 %v93
    %v107 = vpack.c.b16 %v104, %v103
    %v108 = vpack.c.b16 %v106, %v105
    %vm111 = vcmask 261120
    %v113 = vsel %vm111, %v95, 0
    %115 = vmatpush.bf16.msra.mxu0 0
    %116 = vmatpush.bf16.msra.mxu0 0
    %117 = vmatpush.bf16.msra.mxu0 0
    %118 = vmatpush.bf16.msra.mxu0 0
    %119 = vmatpush.bf16.msra.mxu0 0
    %120 = vmatpush.bf16.msra.mxu0 0
    %121 = vmatpush.bf16.msra.mxu0 %v108
    %122 = vmatpush.bf16.msra.mxu0 %v107
    %123 = vmatmul.bf16.gmra.mxu0 %v113
    %v124 = vpop.f32.mrf.mxu0
    %v125 = vadd.f32 %v97, %v124
    %v126 = vpop.f32.mrf.mxu0
    %127 = vdwg.mxu0
    %vm128 = vcmp.gt.f32.partialorder %v125, 0.0
    %v129 = vmin.f32 %v125, 0.0
    %v130 = vmul.f32 %v129, 1.442695
    %v131 = vpow.pop %v130
    %v132 = vsub.f32 %v131, 1.0
    %v133 = vsel %vm128, %v125, %v132
    %v134 = vld [vmem:[#allocation7] sm:$0xf]
    %v135 = vld [vmem:[#allocation7 + $0x4] sm:$0xf]
    %v136 = vld [vmem:[#allocation7 + $0x8] sm:$0xf]
    %v137 = vld [vmem:[#allocation7 + $0xc] sm:$0xf]
    %v138 = vld [vmem:[#allocation7 + $0x10] sm:$0xf]
    %v139 = vld [vmem:[#allocation7 + $0x14] sm:$0xf]
    %v140 = vld [vmem:[#allocation7 + $0x18] sm:$0xf]
    %v141 = vld [vmem:[#allocation7 + $0x1c] sm:$0xf]
    %v142 = vld [vmem:[#allocation7 + $0x20] sm:$0xf]
    %v143 = vld [vmem:[#allocation7 + $0x24] sm:$0xf]
    %v144 = vld [vmem:[#allocation7 + $0x28] sm:$0xf]
    %v145 = vld [vmem:[#allocation7 + $0x2c] sm:$0xf]
    %v146 = vld [vmem:[#allocation7 + $0x30] sm:$0xf]
    %v147 = vld [vmem:[#allocation7 + $0x34] sm:$0xf]
    %v148 = vld [vmem:[#allocation7 + $0x38] sm:$0xf]
    %v149 = vld [vmem:[#allocation7 + $0x3c] sm:$0xf]
    %v150 = vld [vmem:[%s4] sm:$0x1]
    %v151 = vpack.c.bf16 %v133, %v133
    %v153 = vperm.slane %v150, 0
    %v171 = vunpack.c.l.b16 %v134
    %v172 = vunpack.c.l.b16 %v135
    %v173 = vunpack.c.l.b16 %v136
    %v174 = vunpack.c.l.b16 %v137
    %v175 = vunpack.c.l.b16 %v138
    %v176 = vunpack.c.l.b16 %v139
    %v177 = vunpack.c.l.b16 %v140
    %v178 = vunpack.c.l.b16 %v141
    %v179 = vunpack.c.l.b16 %v142
    %v180 = vunpack.c.l.b16 %v143
    %v181 = vunpack.c.l.b16 %v144
    %v182 = vunpack.c.l.b16 %v145
    %v183 = vunpack.c.l.b16 %v146
    %v184 = vunpack.c.l.b16 %v147
    %v185 = vunpack.c.l.b16 %v148
    %v186 = vunpack.c.l.b16 %v149
    %v187 = vpack.c.b16 %v172, %v171
    %v188 = vpack.c.b16 %v174, %v173
    %v189 = vpack.c.b16 %v176, %v175
    %v190 = vpack.c.b16 %v178, %v177
    %v191 = vpack.c.b16 %v180, %v179
    %v192 = vpack.c.b16 %v182, %v181
    %v193 = vpack.c.b16 %v184, %v183
    %v194 = vpack.c.b16 %v186, %v185
    %203 = vmatpush.bf16.msra.mxu0 %v194
    %204 = vmatpush.bf16.msra.mxu0 %v193
    %205 = vmatpush.bf16.msra.mxu0 %v192
    %206 = vmatpush.bf16.msra.mxu0 %v191
    %207 = vmatpush.bf16.msra.mxu0 %v190
    %208 = vmatpush.bf16.msra.mxu0 %v189
    %209 = vmatpush.bf16.msra.mxu0 %v188
    %210 = vmatpush.bf16.msra.mxu0 %v187
    %211 = vmatmul.bf16.gmra.mxu0 %v151
    %v212 = vpop.f32.mrf.mxu0
    %v213 = vadd.f32 %v153, %v212
    %v214 = vpop.f32.mrf.mxu0
    %215 = vdwg.mxu0
    %vm216 = vcmp.gt.f32.partialorder %v213, 0.0
    %v217 = vmin.f32 %v213, 0.0
    %v218 = vmul.f32 %v217, 1.442695
    %v219 = vpow.pop %v218
    %v220 = vsub.f32 %v219, 1.0
    %v221 = vsel %vm216, %v213, %v220
    %v222 = vld [vmem:[#allocation8] sm:$0xf]
    %v223 = vld [vmem:[#allocation8 + $0x4] sm:$0xf]
    %v224 = vld [vmem:[#allocation8 + $0x8] sm:$0xf]
    %v225 = vld [vmem:[#allocation8 + $0xc] sm:$0xf]
    %v226 = vld [vmem:[#allocation8 + $0x10] sm:$0xf]
    %v227 = vld [vmem:[#allocation8 + $0x14] sm:$0xf]
    %v228 = vld [vmem:[#allocation8 + $0x18] sm:$0xf]
    %v229 = vld [vmem:[#allocation8 + $0x1c] sm:$0xf]
    %v230 = vld [vmem:[#allocation8 + $0x20] sm:$0xf]
    %v231 = vld [vmem:[#allocation8 + $0x24] sm:$0xf]
    %v232 = vld [vmem:[#allocation8 + $0x28] sm:$0xf]
    %v233 = vld [vmem:[#allocation8 + $0x2c] sm:$0xf]
    %v234 = vld [vmem:[#allocation8 + $0x30] sm:$0xf]
    %v235 = vld [vmem:[#allocation8 + $0x34] sm:$0xf]
    %v236 = vld [vmem:[#allocation8 + $0x38] sm:$0xf]
    %v237 = vld [vmem:[#allocation8 + $0x3c] sm:$0xf]
    %v238 = vld [vmem:[%s6] sm:$0x1]
    %v239 = vpack.c.bf16 %v221, %v221
    %v241 = vperm.slane %v238, 0
    %v259 = vunpack.c.l.b16 %v222
    %v260 = vunpack.c.l.b16 %v223
    %v261 = vunpack.c.l.b16 %v224
    %v262 = vunpack.c.l.b16 %v225
    %v263 = vunpack.c.l.b16 %v226
    %v264 = vunpack.c.l.b16 %v227
    %v265 = vunpack.c.l.b16 %v228
    %v266 = vunpack.c.l.b16 %v229
    %v267 = vunpack.c.l.b16 %v230
    %v268 = vunpack.c.l.b16 %v231
    %v269 = vunpack.c.l.b16 %v232
    %v270 = vunpack.c.l.b16 %v233
    %v271 = vunpack.c.l.b16 %v234
    %v272 = vunpack.c.l.b16 %v235
    %v273 = vunpack.c.l.b16 %v236
    %v274 = vunpack.c.l.b16 %v237
    %v275 = vpack.c.b16 %v260, %v259
    %v276 = vpack.c.b16 %v262, %v261
    %v277 = vpack.c.b16 %v264, %v263
    %v278 = vpack.c.b16 %v266, %v265
    %v279 = vpack.c.b16 %v268, %v267
    %v280 = vpack.c.b16 %v270, %v269
    %v281 = vpack.c.b16 %v272, %v271
    %v282 = vpack.c.b16 %v274, %v273
    %291 = vmatpush.bf16.msra.mxu0 %v282
    %292 = vmatpush.bf16.msra.mxu0 %v281
    %293 = vmatpush.bf16.msra.mxu0 %v280
    %294 = vmatpush.bf16.msra.mxu0 %v279
    %295 = vmatpush.bf16.msra.mxu0 %v278
    %296 = vmatpush.bf16.msra.mxu0 %v277
    %297 = vmatpush.bf16.msra.mxu0 %v276
    %298 = vmatpush.bf16.msra.mxu0 %v275
    %299 = vmatmul.bf16.gmra.mxu0 %v239
    %v300 = vpop.f32.mrf.mxu0
    %v301 = vadd.f32 %v241, %v300
    %v302 = vpop.f32.mrf.mxu0
    %303 = vdwg.mxu0
    %v304 = vsub.f32 0.0, %v301
    %v305 = vmin.f32 %v304, 60.0
    %v306 = vmul.f32 %v305, 1.442695
    %v307 = vpow.pop %v306
    %v308 = vadd.f32 %v307, 1.0
    %v309 = vrcp.pop %v308
    %310 = vst [vmem:[#allocation10] sm:$0xff] %v309
    // Predicated region
    $region46: #{tpu_custom_call.1} parent=1 // pred_check
      _
    $region47: #{tpu_custom_call.1} parent=1 // pred_check_branch
      %312 = sbr.rel (0) target = $region49
    $region48: #{tpu_custom_call.1} parent=1 // pred_region
      %314 = vsyncadd [#allocation4], 0
      %s316 = sshll.u32 [#allocation10], 4
      %s317 = int_to_ptr.vmem [resolvable:$true] %s316
      %s318 = sshll.u32 %s7, 4
      %s319 = int_to_ptr.hbm [resolvable:$true] %s318
      %321 = dma.vmem_to_hbm [thread:$0]  %s317, 128, %s319, [#allocation4]
    $region49: #{tpu_custom_call.1} parent=1 // pred_fallthru
      _
    // Predicated region
    $region50: #{tpu_custom_call.1} parent=1 // pred_check
      _
    $region51: #{tpu_custom_call.1} parent=1 // pred_check_branch
      %323 = sbr.rel (0) target = $region53
    $region52: #{tpu_custom_call.1} parent=1 // pred_region
      %325 = dma.done [#allocation4], 128
    $region53: #{tpu_custom_call.1} parent=1 // pred_fallthru
      _
    %326 = vsyncpa [#allocation3], 1
    %327 = vsyncpa [#allocation6], 1
    %328 = vsyncpa [#allocation9], 1
    %329 = vsyncpa [#allocation4], 1

</llo_original>
